<compile_context>
chip_gen: v7x
topology: tpu7x:2x2x1
jax: 0.10.0
libtpu: 0.0.40
codegen_flags: <defaults>
</compile_context>

<pallas_src>
import jax
import jax.numpy as jnp
from jax import lax
from jax.experimental import pallas as pl
from jax.experimental.pallas import tpu as pltpu


def _round_up(x, m):
    return ((x + m - 1) // m) * m


def _vmem_capacity_bytes():
    """Per-core VMEM capacity, with a conservative fallback (v7x = 64 MiB)."""
    try:
        info = pltpu.get_tpu_info()
        cap = getattr(info, "vmem_capacity_bytes", None)
        if cap:
            return int(cap)
    except Exception:
        pass
    return 64 * 1024 * 1024


# -----------------------------------------------------------------------------
# Kernel: one (tm, tn) output tile, reduced over the (possibly 1-step) K axis.
# The f32 output tile is the accumulator — it stays resident across the
# innermost K axis, so no VMEM scratch and no final astype/store pass.
# -----------------------------------------------------------------------------
def _linear_bias_kernel(x_ref, w_ref, b_ref, o_ref):
    k = pl.program_id(2)

    @pl.when(k == 0)
    def _():
        # Fold the bias into the accumulator init (no separate add/store pass).
        o_ref[...] = jnp.broadcast_to(b_ref[...].astype(o_ref.dtype), o_ref.shape)

    x = x_ref[...]
    w = w_ref[...]
    if x.dtype != w.dtype:
        x = x.astype(w.dtype)  # in-kernel VPU cast -> native bf16 MXU path

    # x @ w with the weight already in (K, N) layout: canonical MXU contraction,
    # no transpose on either operand.
    o_ref[...] += lax.dot_general(
        x, w,
        dimension_numbers=(((1,), (0,)), ((), ())),
        preferred_element_type=jnp.float32,
    )


# -----------------------------------------------------------------------------
# Tile selection: full-batch M when it fits (weight streams HBM exactly once),
# full-extent K when it fits, lane-multiple N tiles sized to the chip's VMEM.
# -----------------------------------------------------------------------------
def _choose_tiles(B, D, Cp, x_bytes, w_bytes, vmem_budget):
    # --- K: single full-extent block unless D is huge with a clean 128-multiple
    #        divisor (partial contraction blocks would read garbage).
    tk = D
    if D > 4096 and D % 128 == 0:
        tk = 2048 if D % 2048 == 0 else (1024 if D % 1024 == 0 else D)
        while D % tk != 0:
            tk -= 128
        tk = max(tk, 128)

    # --- M: cover the whole batch when feasible.
    if B <= 1024:
        tm = B                      # full-extent block (legal even if not %8)
    else:
        tm = 1024                   # multiple of 8; edge block handled by Pallas

    # --- N: lane-multiple tile that divides Cp (or exact for tiny heads).
    if Cp % 128 == 0:
        tn = min(Cp, 512)
        while Cp % tn != 0:
            tn -= 128
    else:
        tn = Cp                     # tiny unaligned head: exact shape

    # --- v7x has 2 TensorCores sharded over the "parallel" grid axes; if both
    #     the M and N axes collapse to one block, one core idles. Split N.
    if B <= tm and tn == Cp and Cp % 256 == 0:
        tn = Cp // 2

    # --- Fit the double-buffered footprint into the VMEM budget.
    def footprint(tm_, tn_, tk_):
        return (2 * (tm_ * tk_ * x_bytes + tk_ * tn_ * w_bytes + tn_ * 4)
                + 2 * tm_ * tn_ * 4)

    while footprint(tm, tn, tk) > vmem_budget:
        if tn > 128 and Cp % 128 == 0:
            tn = max(128, tn // 2)
            while Cp % tn != 0:
                tn -= 128
        elif tk > 512 and D % 128 == 0:
            tk = max(128, (tk // 2) - (tk // 2) % 128)
            while D % tk != 0:
                tk -= 128
        elif tm > 256:
            tm = max(256, (tm // 2) - (tm // 2) % 8)
        else:
            break
    return tm, tn, tk


def classifier_forward(feature, w_t, b_row, n_classes, *, allow_xla_fast_path=False):
    """feature: (B, D) activations.
    w_t:   (D, Cp) weight, pre-transposed (and lane-padded) once at load time.
    b_row: (1, Cp) f32 bias row, padded once at load time.
    Returns (B, n_classes) float32 (torch nn.Linear semantics)."""
    B, D = feature.shape
    D_w, Cp = w_t.shape
    assert D == D_w, "weight in_features must match feature dim"
    C = n_classes

    if allow_xla_fast_path and B * D * Cp < (1 << 20):
        # Toy sizes: a standalone kernel is pure launch overhead; let XLA fuse
        # (better still: fuse this head into the producer kernel's epilogue).
        out = feature.astype(w_t.dtype) @ w_t + b_row
        return out[:, :C].astype(jnp.float32)

    x_bytes = feature.dtype.itemsize
    w_bytes = w_t.dtype.itemsize
    vmem_cap = _vmem_capacity_bytes()
    tm, tn, tk = _choose_tiles(B, D, Cp, x_bytes, w_bytes, int(vmem_cap * 0.45))

    # N first (most likely axis with >=2 blocks on a classifier), K innermost
    # so the output tile is resident across the reduction.
    grid = (pl.cdiv(Cp, tn), pl.cdiv(B, tm), pl.cdiv(D, tk))

    footprint = (2 * (tm * tk * x_bytes + tk * tn * w_bytes + tn * 4)
                 + 2 * tm * tn * 4)
    vmem_limit = int(min(vmem_cap, max(2 * footprint, 32 * 1024 * 1024)))

    out_p = pl.pallas_call(
        _linear_bias_kernel,
        out_shape=jax.ShapeDtypeStruct((B, Cp), jnp.float32),
        grid_spec=pltpu.PrefetchScalarGridSpec(
            num_scalar_prefetch=0,
            grid=grid,
            in_specs=[
                pl.BlockSpec((tm, tk), lambda j, i, k: (i, k)),   # activations
                pl.BlockSpec((tk, tn), lambda j, i, k: (k, j)),   # weight (D, Cp)
                pl.BlockSpec((1, tn), lambda j, i, k: (0, j)),    # bias row
            ],
            out_specs=pl.BlockSpec((tm, tn), lambda j, i, k: (i, j)),
        ),
        compiler_params=pltpu.CompilerParams(
            dimension_semantics=("parallel", "parallel", "arbitrary"),
            vmem_limit_bytes=vmem_limit,
        ),
    )(feature, w_t, b_row)

    if Cp != C:
        # Only reached for large lane-padded heads; tiny unaligned heads keep
        # Cp == C so no per-call slice happens for them.
        out_p = out_p[:, :C]
    return out_p


class PallasClassifier:
    """One-time parameter prep (amortized across all forward calls)."""

    _SMALL_UNALIGNED_C = 512  # below this, keep an unaligned head exact (no pad/slice)

    def __init__(self, weight, bias, compute_dtype=None):
        C, D = weight.shape
        assert bias.shape == (C,)
        self.n_classes = C
        if C % 128 == 0 or C > self._SMALL_UNALIGNED_C:
            Cp = _round_up(C, 128)          # lane-dense stores for real heads
        else:
            Cp = C                          # tiny head: exact shape
        w_t = jnp.pad(weight.T, ((0, 0), (0, Cp - C)))       # (D, Cp), done ONCE
        b_row = jnp.pad(bias, (0, Cp - C)).reshape(1, Cp)    # (1, Cp), done ONCE
        if compute_dtype is not None:
            w_t = w_t.astype(compute_dtype)                  # e.g. bf16 MXU path
        self.w_t = w_t
        self.b_row = b_row.astype(jnp.float32)

    def __call__(self, feature, **kwargs):
        return classifier_forward(feature, self.w_t, self.b_row, self.n_classes,
                                  **kwargs)


if __name__ == "__main__":
    # Small shapes consistent with the module: Classifier(input_dim=32, n_classes=8).
    B, D, C = 4, 32, 8

    key = jax.random.PRNGKey(0)
    k_x, k_w, k_b = jax.random.split(key, 3)

    feature = jax.random.normal(k_x, (B, D), dtype=jnp.float32)
    # Mimic nn.Linear's uniform(-1/sqrt(D), 1/sqrt(D)) init, deterministically.
    bound = 1.0 / jnp.sqrt(jnp.float32(D))
    weight = jax.random.uniform(k_w, (C, D), jnp.float32, -bound, bound)
    bias = jax.random.uniform(k_b, (C,), jnp.float32, -bound, bound)

    ref = feature @ weight.T + bias

    # --- f32 path (exact) ---------------------------------------------------
    clf = PallasClassifier(weight, bias)
    out = clf(feature)
    jax.block_until_ready(out)
    assert out.shape == (B, C)
    assert jnp.allclose(out, ref, atol=1e-5, rtol=1e-5)

    # --- bf16 MXU path (recommended at real sizes; f32 accumulation) ---------
    clf_bf16 = PallasClassifier(weight, bias, compute_dtype=jnp.bfloat16)
    out_bf16 = clf_bf16(feature.astype(jnp.bfloat16))
    jax.block_until_ready(out_bf16)
    assert out_bf16.shape == (B, C)
    assert jnp.allclose(out_bf16, ref, atol=5e-2, rtol=5e-2)

    print("KERNEL_OK")
</pallas_src>

<mosaic_0001>
module attributes {stable_mosaic.version = 11 : i64} {
  func.func @_linear_bias_kernel(%arg0: i32, %arg1: i32, %arg2: i32, %arg3: memref<4x32xf32, #tpu.memory_space<vmem>>, %arg4: memref<32x8xf32, #tpu.memory_space<vmem>>, %arg5: memref<1x8xf32, #tpu.memory_space<vmem>>, %arg6: memref<4x8xf32, #tpu.memory_space<vmem>>) attributes {dimension_semantics = [#tpu.dimension_semantics<parallel>, #tpu.dimension_semantics<parallel>, #tpu.dimension_semantics<arbitrary>], iteration_bounds = array<i64: 1, 1, 1>, scalar_prefetch = 0 : i64, scratch_operands = 0 : i64, tpu.core_type = #tpu.core_type<tc>, window_params = [{transform_indices = @transform_0, window_bounds = array<i64: 4, 32>}, {transform_indices = @transform_1, window_bounds = array<i64: 32, 8>}, {transform_indices = @transform_2, window_bounds = array<i64: 1, 8>}, {transform_indices = @transform_3, window_bounds = array<i64: 4, 8>}]} {
    %c0_i32 = arith.constant 0 : i32
    %0 = arith.cmpi eq, %arg2, %c0_i32 : i32
    %1 = arith.extui %0 : i1 to i32
    %c0_i32_0 = arith.constant 0 : i32
    %2 = arith.cmpi ne, %1, %c0_i32_0 : i32
    scf.if %2 {
      %c0_8 = arith.constant 0 : index
      %c0_9 = arith.constant 0 : index
      %9 = vector.load %arg5[%c0_8, %c0_9] : memref<1x8xf32, #tpu.memory_space<vmem>>, vector<1x8xf32>
      %10 = vector.shape_cast %9 : vector<1x8xf32> to vector<1x8xf32>
      %11 = vector.broadcast %10 : vector<1x8xf32> to vector<4x8xf32>
      %c0_10 = arith.constant 0 : index
      %c0_11 = arith.constant 0 : index
      %12 = vector.load %arg6[%c0_10, %c0_11] : memref<4x8xf32, #tpu.memory_space<vmem>>, vector<4x8xf32>
      tpu.vector_store %arg6[%c0_10, %c0_11], %11 {strides = array<i32>} : memref<4x8xf32, #tpu.memory_space<vmem>>, vector<4x8xf32>,
    } else {
    }
    %c0 = arith.constant 0 : index
    %c0_1 = arith.constant 0 : index
    %3 = vector.load %arg3[%c0, %c0_1] : memref<4x32xf32, #tpu.memory_space<vmem>>, vector<4x32xf32>
    %c0_2 = arith.constant 0 : index
    %c0_3 = arith.constant 0 : index
    %4 = vector.load %arg4[%c0_2, %c0_3] : memref<32x8xf32, #tpu.memory_space<vmem>>, vector<32x8xf32>
    %c0_4 = arith.constant 0 : index
    %c0_5 = arith.constant 0 : index
    %5 = vector.load %arg6[%c0_4, %c0_5] : memref<4x8xf32, #tpu.memory_space<vmem>>, vector<4x8xf32>
    %cst = arith.constant dense<0.000000e+00> : vector<4x8xf32>
    %6 = tpu.matmul %3, %4, %cst {dimension_numbers = #tpu.dot_dimension_numbers<[1], [0], [0], [1], [0, 0, 1, 1], [], []>} : vector<4x32xf32>, vector<32x8xf32>, vector<4x8xf32> -> vector<4x8xf32>
    %7 = arith.addf %5, %6 : vector<4x8xf32>
    %c0_6 = arith.constant 0 : index
    %c0_7 = arith.constant 0 : index
    %8 = vector.load %arg6[%c0_6, %c0_7] : memref<4x8xf32, #tpu.memory_space<vmem>>, vector<4x8xf32>
    tpu.vector_store %arg6[%c0_6, %c0_7], %7 {strides = array<i32>} : memref<4x8xf32, #tpu.memory_space<vmem>>, vector<4x8xf32>,
    return
  }
  func.func @transform_0(%arg0: i32, %arg1: i32, %arg2: i32) -> (i32, i32) {
    %c0_i32 = arith.constant 0 : i32
    return %arg1, %arg2 : i32, i32
  }
  func.func @transform_1(%arg0: i32, %arg1: i32, %arg2: i32) -> (i32, i32) {
    %c0_i32 = arith.constant 0 : i32
    return %arg2, %arg0 : i32, i32
  }
  func.func @transform_2(%arg0: i32, %arg1: i32, %arg2: i32) -> (i32, i32) {
    %c0_i32 = arith.constant 0 : i32
    %c0_i32_0 = arith.constant 0 : i32
    return %c0_i32, %arg0 : i32, i32
  }
  func.func @transform_3(%arg0: i32, %arg1: i32, %arg2: i32) -> (i32, i32) {
    %c0_i32 = arith.constant 0 : i32
    return %arg1, %arg0 : i32, i32
  }
}

</mosaic_0001>

<llo_original>
// kernel: tpu_custom_call.1
$region0: #{tpu_custom_call.1}
  #allocation0 [shape = 'u32[]', space=smem, size = 0x4, offset = 0x4, fixed_abs, tag = 'smem constant byte address 0x4 - core index']
  #allocation1 [shape = 'u32[144,128]{1,0:T(1,128)}', space=vmem, size = 0x12000, scoped, tag = 'internal scratch']
  %s0 = inlined_call_operand.vmem [shape: f32[4,32], index: 0, kind: input, shape index: {}]
  %s1 = inlined_call_operand.vmem [shape: f32[32,8], index: 1, kind: input, shape index: {}]
  %s2 = inlined_call_operand.vmem [shape: f32[1,8], index: 2, kind: input, shape index: {}]
  %s3 = inlined_call_operand.hbm [shape: f32[4,8], index: 3, kind: output, shape index: {}]
  %s4 = sld [smem:[#allocation0]]
  $region26: #{tpu_custom_call.1} parent=0
    _
  %s6 = ssub.s32 1, %s4
  %s7 = scalar_select 0, %s6, %s4
  $region1: #{tpu_custom_call.1} parent=0
    #allocation2 [shape = 'u8[2048]{0}', space=vmem, size = 0x800, scoped, tag = 'output window, operand 0, single buffered']
    #allocation3 [shape = 's32[1]{0}', space=sflag, size = 0x4, scoped, tag = 'scoped memory for tpu_custom_call.1']
    %8 = vsyncpa [#allocation3], 0
    // Predicated region
    $region2: #{tpu_custom_call.1} parent=1 // pred_check
      _
    $region3: #{tpu_custom_call.1} parent=1 // pred_check_branch
      %10 = sbr.rel (0) target = $region5
    $region4: #{tpu_custom_call.1} parent=1 // pred_region
      _
    $region5: #{tpu_custom_call.1} parent=1 // pred_fallthru
      _
    // Predicated region
    $region6: #{tpu_custom_call.1} parent=1 // pred_check
      _
    $region7: #{tpu_custom_call.1} parent=1 // pred_check_branch
      %12 = sbr.rel (0) target = $region9
    $region8: #{tpu_custom_call.1} parent=1 // pred_region
      _
    $region9: #{tpu_custom_call.1} parent=1 // pred_fallthru
      _
    // Predicated region
    $region10: #{tpu_custom_call.1} parent=1 // pred_check
      _
    $region11: #{tpu_custom_call.1} parent=1 // pred_check_branch
      %14 = sbr.rel (0) target = $region13
    $region12: #{tpu_custom_call.1} parent=1 // pred_region
      _
    $region13: #{tpu_custom_call.1} parent=1 // pred_fallthru
      _
    %p15 = scmp.eq.s32.totalorder 0, 0
    // Predicated region
    $region14: #{tpu_custom_call.1} parent=1 // pred_check
      %p16 = pneg %p15
    $region15: #{tpu_custom_call.1} parent=1 // pred_check_branch
      %18 = sbr.rel (%p16) target = $region17
    $region16: #{tpu_custom_call.1} parent=1 // pred_region
      %v19 = vld [vmem:[%s2] sm:$0x1]
      %v21 = vlaneseq
      %v22 = vshrl.u32 %v21, 7
      %v23 = vsub.s32 0, %v22
      %v24 = vrot.slane %v19, %v23
      %vm26 = vcmask 60416
      %27 = vst.msk [vmem:[#allocation2] sm:$0xf] %vm26, %v24
    $region17: #{tpu_custom_call.1} parent=1 // pred_fallthru
      _
    %v28 = vld [vmem:[%s0] sm:$0xf]
    %v29 = vld [vmem:[%s1] sm:$0xff]
    %v30 = vld [vmem:[%s1 + $0x8] sm:$0xff]
    %v31 = vld [vmem:[%s1 + $0x10] sm:$0xff]
    %v32 = vld [vmem:[%s1 + $0x18] sm:$0xff]
    %v33 = vld [vmem:[#allocation2] sm:$0xf]
    %vm34 = vcmask 261120
    %v36 = vsel %vm34, %v28, 0
    %38 = vmatprep.subr.mxu0 0.0
    %39 = vmatpush1.msra.mxu0 %v29
    %40 = vmatprep.subr.mxu0 0.0
    %41 = vmatpush1.msra.mxu0 %v30
    %42 = vmatprep.subr.mxu0 0.0
    %43 = vmatpush1.msra.mxu0 %v31
    %44 = vmatprep.subr.mxu0 0.0
    %45 = vmatpush1.msra.mxu0 %v32
    %46 = vmatprep.subr.mxu0 0.0
    %47 = vmatpush1.msra.mxu0 0.0
    %48 = vmatprep.subr.mxu0 0.0
    %49 = vmatpush1.msra.mxu0 0.0
    %50 = vmatprep.subr.mxu0 0.0
    %51 = vmatpush1.msra.mxu0 0.0
    %52 = vmatprep.subr.mxu0 0.0
    %53 = vmatpush1.msra.mxu0 0.0
    %54 = vmatprep.subr.mxu0 0.0
    %55 = vmatpush1.msra.mxu0 0.0
    %56 = vmatprep.subr.mxu0 0.0
    %57 = vmatpush1.msra.mxu0 0.0
    %58 = vmatprep.subr.mxu0 0.0
    %59 = vmatpush1.msra.mxu0 0.0
    %60 = vmatprep.subr.mxu0 0.0
    %61 = vmatpush1.msra.mxu0 0.0
    %62 = vmatprep.subr.mxu0 0.0
    %63 = vmatpush1.msra.mxu0 0.0
    %64 = vmatprep.subr.mxu0 0.0
    %65 = vmatpush1.msra.mxu0 0.0
    %66 = vmatprep.subr.mxu0 0.0
    %67 = vmatpush1.msra.mxu0 0.0
    %68 = vmatprep.subr.mxu0 0.0
    %69 = vmatpush1.msra.mxu0 0.0
    %70 = vmatprep.subr.mxu0 0.0
    %71 = vmatpush1.msra.mxu0 0.0
    %72 = vmatprep.subr.mxu0 0.0
    %73 = vmatpush1.msra.mxu0 0.0
    %74 = vmatprep.subr.mxu0 0.0
    %75 = vmatpush1.msra.mxu0 0.0
    %76 = vmatprep.subr.mxu0 0.0
    %77 = vmatpush1.msra.mxu0 0.0
    %78 = vmatprep.subr.mxu0 0.0
    %79 = vmatpush1.msra.mxu0 0.0
    %80 = vmatprep.subr.mxu0 0.0
    %81 = vmatpush1.msra.mxu0 0.0
    %82 = vmatprep.subr.mxu0 0.0
    %83 = vmatpush1.msra.mxu0 0.0
    %84 = vmatprep.subr.mxu0 0.0
    %85 = vmatpush1.msra.mxu0 0.0
    %86 = vmatprep.subr.mxu0 0.0
    %87 = vmatpush1.msra.mxu0 0.0
    %88 = vmatprep.subr.mxu0 0.0
    %89 = vmatpush1.msra.mxu0 0.0
    %90 = vmatprep.subr.mxu0 0.0
    %91 = vmatpush1.msra.mxu0 0.0
    %92 = vmatprep.subr.mxu0 0.0
    %93 = vmatpush1.msra.mxu0 0.0
    %94 = vmatprep.subr.mxu0 0.0
    %95 = vmatpush1.msra.mxu0 0.0
    %96 = vmatprep.subr.mxu0 0.0
    %97 = vmatpush1.msra.mxu0 0.0
    %98 = vmatprep.subr.mxu0 0.0
    %99 = vmatpush1.msra.mxu0 0.0
    %100 = vmatprep.subr.mxu0 0.0
    %101 = vmatpush1.msra.mxu0 0.0
    %102 = vmatprep.mubr.f32.mxu0 0.0
    %103 = vmatmul.mubr.f32.gmra.mrb[0].mxu0 %v36
    %v104 = vpop.f32.mrb[0].mxu0
    %v105 = vadd.f32 0.0, %v104
    %v106 = vpop.f32.mrb[0].mxu0
    %107 = vdwg.mxu0
    %v108 = vadd.f32 %v33, %v105
    %vm109 = vcmask 60416
    %110 = vst.msk [vmem:[#allocation2] sm:$0xf] %vm109, %v108
    // Predicated region
    $region18: #{tpu_custom_call.1} parent=1 // pred_check
      _
    $region19: #{tpu_custom_call.1} parent=1 // pred_check_branch
      %112 = sbr.rel (0) target = $region21
    $region20: #{tpu_custom_call.1} parent=1 // pred_region
      %s114 = ssub.s32 64, 64
      %115 = vsyncadd [#allocation3], %s114
      %s117 = sshll.u32 [#allocation2], 4
      %s118 = int_to_ptr.vmem [resolvable:$true] %s117
      %120 = dma.vmem_to_hbm [thread:$0]  %s118, 64, %s3, [#allocation3]
    $region21: #{tpu_custom_call.1} parent=1 // pred_fallthru
      _
    // Predicated region
    $region22: #{tpu_custom_call.1} parent=1 // pred_check
      _
    $region23: #{tpu_custom_call.1} parent=1 // pred_check_branch
      %122 = sbr.rel (0) target = $region25
    $region24: #{tpu_custom_call.1} parent=1 // pred_region
      %123 = dma.done [#allocation3], 64
    $region25: #{tpu_custom_call.1} parent=1 // pred_fallthru
      _
    %124 = vsyncpa [#allocation3], 1

</llo_original>
